<compile_context>
chip_gen: v6e
topology: v6e:2x2x1
jax: 0.10.0
libtpu: 0.0.40
codegen_flags: <defaults>
</compile_context>

<pallas_src>
import functools

import jax
import jax.numpy as jnp
import numpy as np
from jax.experimental import pallas as pl
from jax.experimental.pallas import tpu as pltpu

LOG_STD_MAX = 2.0
LOG_STD_MIN = -20.0

LANE = 128      # TPU lane width
H1 = 400
H2 = 300
H1_PAD = 512    # 400 -> 512
H2_PAD = 384    # 300 -> 384


def _round_up(n, m):
    return ((n + m - 1) // m) * m


def actor_kernel(x_ref, w1_ref, b1_ref, w2_ref, b2_ref, w3_ref, b3_ref,
                 eps_ref, out_ref, *, max_action):
    # Layer 1 + ReLU (bf16 MXU matmul, f32 accumulate / epilogue)
    h1 = jnp.dot(x_ref[...], w1_ref[...], preferred_element_type=jnp.float32)
    h1 = jnp.maximum(h1 + b1_ref[...], 0.0)

    # Layer 2 + ReLU
    h2 = jnp.dot(h1.astype(jnp.bfloat16), w2_ref[...],
                 preferred_element_type=jnp.float32)
    h2 = jnp.maximum(h2 + b2_ref[...], 0.0)

    # Layer 3: produces [mu | log_std] in two separate 128-lane tiles.
    y = jnp.dot(h2.astype(jnp.bfloat16), w3_ref[...],
                preferred_element_type=jnp.float32) + b3_ref[...]

    mu = y[:, :LANE]          # tile-aligned slice (free)
    log_std = y[:, LANE:]     # tile-aligned slice (free)

    # squash log_std into [LOG_STD_MIN, LOG_STD_MAX]
    log_std = jnp.tanh(log_std)
    log_std = LOG_STD_MIN + 0.5 * (LOG_STD_MAX - LOG_STD_MIN) * (log_std + 1.0)
    std = jnp.exp(log_std)

    # Normal(mu, std).rsample() = mu + std * eps ; then tanh-squash and scale.
    act = jnp.tanh(mu + std * eps_ref[...])
    out_ref[...] = (max_action * act).astype(out_ref.dtype)


def init_actor_params(key, state_dim, action_dim):
    """PyTorch nn.Linear-style init (U[-1/sqrt(fan_in), 1/sqrt(fan_in)]), weights (in, out)."""
    def linear(k, fan_in, fan_out):
        kw, kb = jax.random.split(k)
        bound = 1.0 / jnp.sqrt(fan_in)
        w = jax.random.uniform(kw, (fan_in, fan_out), jnp.float32, -bound, bound)
        b = jax.random.uniform(kb, (1, fan_out), jnp.float32, -bound, bound)
        return w, b

    k1, k2, k3 = jax.random.split(key, 3)
    w1, b1 = linear(k1, state_dim, H1)
    w2, b2 = linear(k2, H1, H2)
    w3, b3 = linear(k3, H2, action_dim * 2)
    return (w1, b1, w2, b2, w3, b3)


def prepare_actor_params(params, state_dim, action_dim):
    """Pad to lane-aligned shapes, split mu/log_std into separate 128-lane tiles,
    cast matmul weights to bf16 (biases stay f32). Done once, amortized over calls."""
    w1, b1, w2, b2, w3, b3 = params
    d_in_pad = _round_up(max(state_dim, LANE), LANE)

    w1p = jnp.zeros((d_in_pad, H1_PAD), jnp.float32).at[:state_dim, :H1].set(w1)
    b1p = jnp.zeros((1, H1_PAD), jnp.float32).at[:, :H1].set(b1)

    w2p = jnp.zeros((H1_PAD, H2_PAD), jnp.float32).at[:H1, :H2].set(w2)
    b2p = jnp.zeros((1, H2_PAD), jnp.float32).at[:, :H2].set(b2)

    # mu weights -> lanes [0, action_dim); log_std weights -> lanes [128, 128+action_dim)
    w3p = jnp.zeros((H2_PAD, 2 * LANE), jnp.float32)
    w3p = w3p.at[:H2, :action_dim].set(w3[:, :action_dim])
    w3p = w3p.at[:H2, LANE:LANE + action_dim].set(w3[:, action_dim:])
    b3p = jnp.zeros((1, 2 * LANE), jnp.float32)
    b3p = b3p.at[:, :action_dim].set(b3[:, :action_dim])
    b3p = b3p.at[:, LANE:LANE + action_dim].set(b3[:, action_dim:])

    return (w1p.astype(jnp.bfloat16), b1p,
            w2p.astype(jnp.bfloat16), b2p,
            w3p.astype(jnp.bfloat16), b3p)


def actor_forward(x, padded_params, eps, *, action_dim, max_action):
    w1p, b1p, w2p, b2p, w3p, b3p = padded_params
    batch, state_dim = x.shape
    d_in_pad = w1p.shape[0]

    # Lane-pad the tiny per-step inputs (zeros in padded lanes).
    x_pad = jnp.zeros((batch, d_in_pad), jnp.bfloat16)
    x_pad = x_pad.at[:, :state_dim].set(x.astype(jnp.bfloat16))
    eps_pad = jnp.zeros((batch, LANE), jnp.float32).at[:, :action_dim].set(eps)

    kernel = functools.partial(actor_kernel, max_action=max_action)
    vmem_spec = lambda: pl.BlockSpec(memory_space=pltpu.MemorySpace.VMEM)

    out_pad = pl.pallas_call(
        kernel,
        out_shape=jax.ShapeDtypeStruct((batch, LANE), jnp.float32),
        in_specs=[vmem_spec() for _ in range(8)],
        out_specs=vmem_spec(),
    )(x_pad, w1p, b1p, w2p, b2p, w3p, b3p, eps_pad)

    return out_pad[:, :action_dim]


def actor_reference(x, params, eps, *, action_dim, max_action):
    """Pure-JAX f32 reference matching the PyTorch module (with explicit eps)."""
    w1, b1, w2, b2, w3, b3 = params
    h1 = jnp.maximum(x @ w1 + b1, 0.0)
    h2 = jnp.maximum(h1 @ w2 + b2, 0.0)
    y = h2 @ w3 + b3
    mu, log_std = y[:, :action_dim], y[:, action_dim:]
    log_std = jnp.tanh(log_std)
    log_std = LOG_STD_MIN + 0.5 * (LOG_STD_MAX - LOG_STD_MIN) * (log_std + 1.0)
    std = jnp.exp(log_std)
    return max_action * jnp.tanh(mu + std * eps)


if __name__ == "__main__":
    state_dim = 16
    action_dim = 8
    max_action = 1.0
    batch = 2

    key = jax.random.PRNGKey(0)
    k_params, k_x, k_eps = jax.random.split(key, 3)

    params = init_actor_params(k_params, state_dim, action_dim)
    padded_params = prepare_actor_params(params, state_dim, action_dim)

    x = jax.random.normal(k_x, (batch, state_dim), jnp.float32)
    eps = jax.random.normal(k_eps, (batch, action_dim), jnp.float32)

    out = actor_forward(x, padded_params, eps, action_dim=action_dim,
                        max_action=max_action)
    out = jax.block_until_ready(out)

    ref = actor_reference(x, params, eps, action_dim=action_dim,
                          max_action=max_action)

    assert out.shape == (batch, action_dim)
    assert bool(jnp.all(jnp.isfinite(out)))
    assert bool(jnp.all(jnp.abs(out) <= max_action + 1e-6))
    # bf16 matmul inputs, f32 accumulation/epilogue -> loose tolerance.
    assert np.allclose(np.asarray(out), np.asarray(ref), atol=5e-2), (out, ref)
    print("KERNEL_OK")
</pallas_src>

<mosaic_0001>
module attributes {stable_mosaic.version = 11 : i64} {
  func.func @actor_kernel(%arg0: memref<2x128xbf16, #tpu.memory_space<vmem>>, %arg1: memref<128x512xbf16, #tpu.memory_space<vmem>>, %arg2: memref<1x512xf32, #tpu.memory_space<vmem>>, %arg3: memref<512x384xbf16, #tpu.memory_space<vmem>>, %arg4: memref<1x384xf32, #tpu.memory_space<vmem>>, %arg5: memref<384x256xbf16, #tpu.memory_space<vmem>>, %arg6: memref<1x256xf32, #tpu.memory_space<vmem>>, %arg7: memref<2x128xf32, #tpu.memory_space<vmem>>, %arg8: memref<2x128xf32, #tpu.memory_space<vmem>>) attributes {dimension_semantics = [], scalar_prefetch = 0 : i64, scratch_operands = 0 : i64, tpu.core_type = #tpu.core_type<tc>} {
    %c0 = arith.constant 0 : index
    %c0_0 = arith.constant 0 : index
    %0 = vector.load %arg0[%c0, %c0_0] : memref<2x128xbf16, #tpu.memory_space<vmem>>, vector<2x128xbf16>
    %c0_1 = arith.constant 0 : index
    %c0_2 = arith.constant 0 : index
    %1 = vector.load %arg1[%c0_1, %c0_2] : memref<128x512xbf16, #tpu.memory_space<vmem>>, vector<128x512xbf16>
    %cst = arith.constant dense<0.000000e+00> : vector<2x512xf32>
    %2 = tpu.matmul %0, %1, %cst {dimension_numbers = #tpu.dot_dimension_numbers<[1], [0], [0], [1], [0, 0, 1, 1], [], []>} : vector<2x128xbf16>, vector<128x512xbf16>, vector<2x512xf32> -> vector<2x512xf32>
    %c0_3 = arith.constant 0 : index
    %c0_4 = arith.constant 0 : index
    %3 = vector.load %arg2[%c0_3, %c0_4] : memref<1x512xf32, #tpu.memory_space<vmem>>, vector<1x512xf32>
    %4 = vector.broadcast %3 : vector<1x512xf32> to vector<2x512xf32>
    %5 = arith.addf %2, %4 : vector<2x512xf32>
    %cst_5 = arith.constant 0.000000e+00 : f32
    %6 = vector.broadcast %cst_5 : f32 to vector<2x512xf32>
    %7 = arith.maximumf %5, %6 : vector<2x512xf32>
    %8 = arith.truncf %7 : vector<2x512xf32> to vector<2x512xbf16>
    %c0_6 = arith.constant 0 : index
    %c0_7 = arith.constant 0 : index
    %9 = vector.load %arg3[%c0_6, %c0_7] : memref<512x384xbf16, #tpu.memory_space<vmem>>, vector<512x384xbf16>
    %cst_8 = arith.constant dense<0.000000e+00> : vector<2x384xf32>
    %10 = tpu.matmul %8, %9, %cst_8 {dimension_numbers = #tpu.dot_dimension_numbers<[1], [0], [0], [1], [0, 0, 1, 1], [], []>} : vector<2x512xbf16>, vector<512x384xbf16>, vector<2x384xf32> -> vector<2x384xf32>
    %c0_9 = arith.constant 0 : index
    %c0_10 = arith.constant 0 : index
    %11 = vector.load %arg4[%c0_9, %c0_10] : memref<1x384xf32, #tpu.memory_space<vmem>>, vector<1x384xf32>
    %12 = vector.broadcast %11 : vector<1x384xf32> to vector<2x384xf32>
    %13 = arith.addf %10, %12 : vector<2x384xf32>
    %cst_11 = arith.constant 0.000000e+00 : f32
    %14 = vector.broadcast %cst_11 : f32 to vector<2x384xf32>
    %15 = arith.maximumf %13, %14 : vector<2x384xf32>
    %16 = arith.truncf %15 : vector<2x384xf32> to vector<2x384xbf16>
    %c0_12 = arith.constant 0 : index
    %c0_13 = arith.constant 0 : index
    %17 = vector.load %arg5[%c0_12, %c0_13] : memref<384x256xbf16, #tpu.memory_space<vmem>>, vector<384x256xbf16>
    %cst_14 = arith.constant dense<0.000000e+00> : vector<2x256xf32>
    %18 = tpu.matmul %16, %17, %cst_14 {dimension_numbers = #tpu.dot_dimension_numbers<[1], [0], [0], [1], [0, 0, 1, 1], [], []>} : vector<2x384xbf16>, vector<384x256xbf16>, vector<2x256xf32> -> vector<2x256xf32>
    %c0_15 = arith.constant 0 : index
    %c0_16 = arith.constant 0 : index
    %19 = vector.load %arg6[%c0_15, %c0_16] : memref<1x256xf32, #tpu.memory_space<vmem>>, vector<1x256xf32>
    %20 = vector.broadcast %19 : vector<1x256xf32> to vector<2x256xf32>
    %21 = arith.addf %18, %20 : vector<2x256xf32>
    %22 = vector.extract_strided_slice %21 {offsets = [0, 0], sizes = [2, 128], strides = [1, 1]} : vector<2x256xf32> to vector<2x128xf32>
    %23 = vector.extract_strided_slice %21 {offsets = [0, 128], sizes = [2, 128], strides = [1, 1]} : vector<2x256xf32> to vector<2x128xf32>
    %24 = math.tanh %23 : vector<2x128xf32>
    %cst_17 = arith.constant 1.000000e+00 : f32
    %25 = vector.broadcast %cst_17 : f32 to vector<2x128xf32>
    %26 = arith.addf %24, %25 : vector<2x128xf32>
    %cst_18 = arith.constant 1.100000e+01 : f32
    %27 = vector.broadcast %cst_18 : f32 to vector<2x128xf32>
    %28 = arith.mulf %27, %26 : vector<2x128xf32>
    %cst_19 = arith.constant -2.000000e+01 : f32
    %29 = vector.broadcast %cst_19 : f32 to vector<2x128xf32>
    %30 = arith.addf %29, %28 : vector<2x128xf32>
    %31 = math.exp %30 : vector<2x128xf32>
    %c0_20 = arith.constant 0 : index
    %c0_21 = arith.constant 0 : index
    %32 = vector.load %arg7[%c0_20, %c0_21] : memref<2x128xf32, #tpu.memory_space<vmem>>, vector<2x128xf32>
    %33 = arith.mulf %31, %32 : vector<2x128xf32>
    %34 = arith.addf %22, %33 : vector<2x128xf32>
    %35 = math.tanh %34 : vector<2x128xf32>
    %cst_22 = arith.constant 1.000000e+00 : f32
    %36 = vector.broadcast %cst_22 : f32 to vector<2x128xf32>
    %37 = arith.mulf %36, %35 : vector<2x128xf32>
    %c0_23 = arith.constant 0 : index
    %c0_24 = arith.constant 0 : index
    %38 = vector.load %arg8[%c0_23, %c0_24] : memref<2x128xf32, #tpu.memory_space<vmem>>, vector<2x128xf32>
    tpu.vector_store %arg8[%c0_23, %c0_24], %37 {strides = array<i32>} : memref<2x128xf32, #tpu.memory_space<vmem>>, vector<2x128xf32>,
    return
  }
}

</mosaic_0001>

<llo_original>
// kernel: tpu_custom_call.1
$region0: #{tpu_custom_call.1}
  #allocation0 [shape = 'u32[]', space=smem, size = 0x4, offset = 0x4, fixed_abs, tag = 'smem constant byte address 0x4 - core index']
  #allocation1 [shape = 'u32[144,128]{1,0:T(1,128)}', space=vmem, size = 0x12000, scoped, tag = 'internal scratch']
  %s0 = inlined_call_operand.hbm [shape: bf16[2,128], index: 0, kind: input, shape index: {}]
  %s1 = inlined_call_operand.hbm [shape: bf16[128,512], index: 1, kind: input, shape index: {}]
  %s2 = inlined_call_operand.hbm [shape: f32[1,512], index: 2, kind: input, shape index: {}]
  %s3 = inlined_call_operand.hbm [shape: bf16[512,384], index: 3, kind: input, shape index: {}]
  %s4 = inlined_call_operand.vmem [shape: f32[1,384], index: 4, kind: input, shape index: {}]
  %s5 = inlined_call_operand.hbm [shape: bf16[384,256], index: 5, kind: input, shape index: {}]
  %s6 = inlined_call_operand.vmem [shape: f32[1,256], index: 6, kind: input, shape index: {}]
  %s7 = inlined_call_operand.vmem [shape: f32[2,128], index: 7, kind: input, shape index: {}]
  %s8 = inlined_call_operand.hbm [shape: f32[2,128], index: 8, kind: output, shape index: {}]
  %s9 = sld [smem:[#allocation0]]
  $region62: #{tpu_custom_call.1} parent=0
    _
  %s11 = ssub.s32 1, %s9
  %s12 = scalar_select 0, %s11, %s9
  $region1: #{tpu_custom_call.1} parent=0
    #allocation2 [shape = 'u8[512]{0}', space=vmem, size = 0x400, scoped, tag = 'input window, operand 0, single buffered']
    #allocation3 [shape = 's32[1]{0}', space=sflag, size = 0x4, scoped, tag = 'scoped memory for tpu_custom_call.1']
    #allocation4 [shape = 's32[1]{0}', space=sflag, size = 0x4, scoped, tag = 'scoped memory for tpu_custom_call.1']
    #allocation5 [shape = 'u8[131072]{0}', space=vmem, size = 0x20000, scoped, tag = 'input window, operand 1, single buffered']
    #allocation6 [shape = 's32[1]{0}', space=sflag, size = 0x4, scoped, tag = 'scoped memory for tpu_custom_call.1']
    #allocation7 [shape = 'u8[2048]{0}', space=vmem, size = 0x800, scoped, tag = 'input window, operand 2, single buffered']
    #allocation8 [shape = 'u8[393216]{0}', space=vmem, size = 0x60000, scoped, tag = 'input window, operand 3, single buffered']
    #allocation9 [shape = 's32[1]{0}', space=sflag, size = 0x4, scoped, tag = 'scoped memory for tpu_custom_call.1']
    #allocation10 [shape = 'u8[196608]{0}', space=vmem, size = 0x30000, scoped, tag = 'input window, operand 5, single buffered']
    #allocation11 [shape = 'u8[1024]{0}', space=vmem, size = 0x400, scoped, tag = 'output window, operand 0, single buffered']
    %13 = vsyncpa [#allocation3], 0
    %14 = vsyncpa [#allocation6], 0
    %15 = vsyncpa [#allocation9], 0
    %16 = vsyncpa [#allocation4], 0
    // Predicated region
    $region2: #{tpu_custom_call.1} parent=1 // pred_check
      _
    $region3: #{tpu_custom_call.1} parent=1 // pred_check_branch
      %18 = sbr.rel (0) target = $region5
    $region4: #{tpu_custom_call.1} parent=1 // pred_region
      %s20 = ssub.s32 16, 16
      %21 = vsyncadd [#allocation3], %s20
      %s23 = sshll.u32 [#allocation2], 4
      %s24 = int_to_ptr.vmem [resolvable:$true] %s23
      %26 = dma.hbm_to_vmem [thread:$0]  %s0, 16, %s24, [#allocation3]
    $region5: #{tpu_custom_call.1} parent=1 // pred_fallthru
      _
    // Predicated region
    $region6: #{tpu_custom_call.1} parent=1 // pred_check
      _
    $region7: #{tpu_custom_call.1} parent=1 // pred_check_branch
      %28 = sbr.rel (0) target = $region9
    $region8: #{tpu_custom_call.1} parent=1 // pred_region
      %s30 = ssub.s32 4096, 4096
      %31 = vsyncadd [#allocation6], %s30
      %s32 = sshll.u32 [#allocation5], 4
      %s33 = int_to_ptr.vmem [resolvable:$true] %s32
      %38 = dma.hbm_to_vmem [thread:$0]  %s1, 4096, %s33, [#allocation6], 256, 256, 16
    $region9: #{tpu_custom_call.1} parent=1 // pred_fallthru
      _
    // Predicated region
    $region10: #{tpu_custom_call.1} parent=1 // pred_check
      _
    $region11: #{tpu_custom_call.1} parent=1 // pred_check_branch
      %40 = sbr.rel (0) target = $region13
    $region12: #{tpu_custom_call.1} parent=1 // pred_region
      %s42 = ssub.s32 64, 64
      %43 = vsyncadd [#allocation6], %s42
      %s45 = sshll.u32 [#allocation7], 4
      %s46 = int_to_ptr.vmem [resolvable:$true] %s45
      %48 = dma.hbm_to_vmem [thread:$0]  %s2, 64, %s46, [#allocation6]
    $region13: #{tpu_custom_call.1} parent=1 // pred_fallthru
      _
    // Predicated region
    $region14: #{tpu_custom_call.1} parent=1 // pred_check
      _
    $region15: #{tpu_custom_call.1} parent=1 // pred_check_branch
      %50 = sbr.rel (0) target = $region17
    $region16: #{tpu_custom_call.1} parent=1 // pred_region
      %s52 = ssub.s32 12288, 12288
      %53 = vsyncadd [#allocation9], %s52
      %s54 = sshll.u32 [#allocation8], 4
      %s55 = int_to_ptr.vmem [resolvable:$true] %s54
      %60 = dma.hbm_to_vmem [thread:$0]  %s3, 12288, %s55, [#allocation9], 192, 192, 12
    $region17: #{tpu_custom_call.1} parent=1 // pred_fallthru
      _
    // Predicated region
    $region18: #{tpu_custom_call.1} parent=1 // pred_check
      _
    $region19: #{tpu_custom_call.1} parent=1 // pred_check_branch
      %62 = sbr.rel (0) target = $region21
    $region20: #{tpu_custom_call.1} parent=1 // pred_region
      _
    $region21: #{tpu_custom_call.1} parent=1 // pred_fallthru
      _
    // Predicated region
    $region22: #{tpu_custom_call.1} parent=1 // pred_check
      _
    $region23: #{tpu_custom_call.1} parent=1 // pred_check_branch
      %64 = sbr.rel (0) target = $region25
    $region24: #{tpu_custom_call.1} parent=1 // pred_region
      %s66 = ssub.s32 6144, 6144
      %67 = vsyncadd [#allocation9], %s66
      %s68 = sshll.u32 [#allocation10], 4
      %s69 = int_to_ptr.vmem [resolvable:$true] %s68
      %74 = dma.hbm_to_vmem [thread:$0]  %s5, 6144, %s69, [#allocation9], 128, 128, 8
    $region25: #{tpu_custom_call.1} parent=1 // pred_fallthru
      _
    // Predicated region
    $region26: #{tpu_custom_call.1} parent=1 // pred_check
      _
    $region27: #{tpu_custom_call.1} parent=1 // pred_check_branch
      %76 = sbr.rel (0) target = $region29
    $region28: #{tpu_custom_call.1} parent=1 // pred_region
      _
    $region29: #{tpu_custom_call.1} parent=1 // pred_fallthru
      _
    // Predicated region
    $region30: #{tpu_custom_call.1} parent=1 // pred_check
      _
    $region31: #{tpu_custom_call.1} parent=1 // pred_check_branch
      %78 = sbr.rel (0) target = $region33
    $region32: #{tpu_custom_call.1} parent=1 // pred_region
      _
    $region33: #{tpu_custom_call.1} parent=1 // pred_fallthru
      _
    // Predicated region
    $region34: #{tpu_custom_call.1} parent=1 // pred_check
      _
    $region35: #{tpu_custom_call.1} parent=1 // pred_check_branch
      %80 = sbr.rel (0) target = $region37
    $region36: #{tpu_custom_call.1} parent=1 // pred_region
      %81 = dma.done [#allocation3], 16
    $region37: #{tpu_custom_call.1} parent=1 // pred_fallthru
      _
    // Predicated region
    $region38: #{tpu_custom_call.1} parent=1 // pred_check
      _
    $region39: #{tpu_custom_call.1} parent=1 // pred_check_branch
      %83 = sbr.rel (0) target = $region41
    $region40: #{tpu_custom_call.1} parent=1 // pred_region
      %84 = dma.done [#allocation6], 4096
    $region41: #{tpu_custom_call.1} parent=1 // pred_fallthru
      _
    // Predicated region
    $region42: #{tpu_custom_call.1} parent=1 // pred_check
      _
    $region43: #{tpu_custom_call.1} parent=1 // pred_check_branch
      %86 = sbr.rel (0) target = $region45
    $region44: #{tpu_custom_call.1} parent=1 // pred_region
      %87 = dma.done [#allocation6], 64
    $region45: #{tpu_custom_call.1} parent=1 // pred_fallthru
      _
    // Predicated region
    $region46: #{tpu_custom_call.1} parent=1 // pred_check
      _
    $region47: #{tpu_custom_call.1} parent=1 // pred_check_branch
      %89 = sbr.rel (0) target = $region49
    $region48: #{tpu_custom_call.1} parent=1 // pred_region
      %90 = dma.done [#allocation9], 12288
    $region49: #{tpu_custom_call.1} parent=1 // pred_fallthru
      _
    // Predicated region
    $region50: #{tpu_custom_call.1} parent=1 // pred_check
      _
    $region51: #{tpu_custom_call.1} parent=1 // pred_check_branch
      %92 = sbr.rel (0) target = $region53
    $region52: #{tpu_custom_call.1} parent=1 // pred_region
      %93 = dma.done [#allocation9], 6144
    $region53: #{tpu_custom_call.1} parent=1 // pred_fallthru
      _
    %v95 = vld [vmem:[#allocation2] sm:$0x1]
    %v96 = vld [vmem:[#allocation5] sm:$0xff]
    %v97 = vld [vmem:[#allocation5 + $0x8] sm:$0xff]
    %v98 = vld [vmem:[#allocation5 + $0x10] sm:$0xff]
    %v99 = vld [vmem:[#allocation5 + $0x18] sm:$0xff]
    %v100 = vld [vmem:[#allocation5 + $0x20] sm:$0xff]
    %v101 = vld [vmem:[#allocation5 + $0x28] sm:$0xff]
    %v102 = vld [vmem:[#allocation5 + $0x30] sm:$0xff]
    %v103 = vld [vmem:[#allocation5 + $0x38] sm:$0xff]
    %v104 = vld [vmem:[#allocation5 + $0x40] sm:$0xff]
    %v105 = vld [vmem:[#allocation5 + $0x48] sm:$0xff]
    %v106 = vld [vmem:[#allocation5 + $0x50] sm:$0xff]
    %v107 = vld [vmem:[#allocation5 + $0x58] sm:$0xff]
    %v108 = vld [vmem:[#allocation5 + $0x60] sm:$0xff]
    %v109 = vld [vmem:[#allocation5 + $0x68] sm:$0xff]
    %v110 = vld [vmem:[#allocation5 + $0x70] sm:$0xff]
    %v111 = vld [vmem:[#allocation5 + $0x78] sm:$0xff]
    %v112 = vld [vmem:[#allocation5 + $0x80] sm:$0xff]
    %v113 = vld [vmem:[#allocation5 + $0x88] sm:$0xff]
    %v114 = vld [vmem:[#allocation5 + $0x90] sm:$0xff]
    %v115 = vld [vmem:[#allocation5 + $0x98] sm:$0xff]
    %v116 = vld [vmem:[#allocation5 + $0xa0] sm:$0xff]
    %v117 = vld [vmem:[#allocation5 + $0xa8] sm:$0xff]
    %v118 = vld [vmem:[#allocation5 + $0xb0] sm:$0xff]
    %v119 = vld [vmem:[#allocation5 + $0xb8] sm:$0xff]
    %v120 = vld [vmem:[#allocation5 + $0xc0] sm:$0xff]
    %v121 = vld [vmem:[#allocation5 + $0xc8] sm:$0xff]
    %v122 = vld [vmem:[#allocation5 + $0xd0] sm:$0xff]
    %v123 = vld [vmem:[#allocation5 + $0xd8] sm:$0xff]
    %v124 = vld [vmem:[#allocation5 + $0xe0] sm:$0xff]
    %v125 = vld [vmem:[#allocation5 + $0xe8] sm:$0xff]
    %v126 = vld [vmem:[#allocation5 + $0xf0] sm:$0xff]
    %v127 = vld [vmem:[#allocation5 + $0xf8] sm:$0xff]
    %v128 = vld [vmem:[#allocation7] sm:$0xf]
    %v130 = vlaneseq
    %v131 = vshrl.u32 %v130, 7
    %v132 = vsub.s32 0, %v131
    %v133 = vrot.slane %v128, %v132
    %v134 = vlaneseq
    %v135 = vshrl.u32 %v134, 7
    %v136 = vsub.s32 1, %v135
    %v137 = vrot.slane %v128, %v136
    %v138 = vlaneseq
    %v139 = vshrl.u32 %v138, 7
    %v140 = vsub.s32 2, %v139
    %v141 = vrot.slane %v128, %v140
    %v142 = vlaneseq
    %v143 = vshrl.u32 %v142, 7
    %v144 = vsub.s32 3, %v143
    %v145 = vrot.slane %v128, %v144
    %v182 = vunpack.c.l.b16 %v96
    %v183 = vunpack.c.h.b16 %v96
    %v184 = vunpack.c.l.b16 %v97
    %v185 = vunpack.c.h.b16 %v97
    %v186 = vunpack.c.l.b16 %v98
    %v187 = vunpack.c.h.b16 %v98
    %v188 = vunpack.c.l.b16 %v99
    %v189 = vunpack.c.h.b16 %v99
    %v190 = vunpack.c.l.b16 %v100
    %v191 = vunpack.c.h.b16 %v100
    %v192 = vunpack.c.l.b16 %v101
    %v193 = vunpack.c.h.b16 %v101
    %v194 = vunpack.c.l.b16 %v102
    %v195 = vunpack.c.h.b16 %v102
    %v196 = vunpack.c.l.b16 %v103
    %v197 = vunpack.c.h.b16 %v103
    %v198 = vunpack.c.l.b16 %v104
    %v199 = vunpack.c.h.b16 %v104
    %v200 = vunpack.c.l.b16 %v105
    %v201 = vunpack.c.h.b16 %v105
    %v202 = vunpack.c.l.b16 %v106
    %v203 = vunpack.c.h.b16 %v106
    %v204 = vunpack.c.l.b16 %v107
    %v205 = vunpack.c.h.b16 %v107
    %v206 = vunpack.c.l.b16 %v108
    %v207 = vunpack.c.h.b16 %v108
    %v208 = vunpack.c.l.b16 %v109
    %v209 = vunpack.c.h.b16 %v109
    %v210 = vunpack.c.l.b16 %v110
    %v211 = vunpack.c.h.b16 %v110
    %v212 = vunpack.c.l.b16 %v111
    %v213 = vunpack.c.h.b16 %v111
    %v214 = vunpack.c.l.b16 %v112
    %v215 = vunpack.c.h.b16 %v112
    %v216 = vunpack.c.l.b16 %v113
    %v217 = vunpack.c.h.b16 %v113
    %v218 = vunpack.c.l.b16 %v114
    %v219 = vunpack.c.h.b16 %v114
    %v220 = vunpack.c.l.b16 %v115
    %v221 = vunpack.c.h.b16 %v115
    %v222 = vunpack.c.l.b16 %v116
    %v223 = vunpack.c.h.b16 %v116
    %v224 = vunpack.c.l.b16 %v117
    %v225 = vunpack.c.h.b16 %v117
    %v226 = vunpack.c.l.b16 %v118
    %v227 = vunpack.c.h.b16 %v118
    %v228 = vunpack.c.l.b16 %v119
    %v229 = vunpack.c.h.b16 %v119
    %v230 = vunpack.c.l.b16 %v120
    %v231 = vunpack.c.h.b16 %v120
    %v232 = vunpack.c.l.b16 %v121
    %v233 = vunpack.c.h.b16 %v121
    %v234 = vunpack.c.l.b16 %v122
    %v235 = vunpack.c.h.b16 %v122
    %v236 = vunpack.c.l.b16 %v123
    %v237 = vunpack.c.h.b16 %v123
    %v238 = vunpack.c.l.b16 %v124
    %v239 = vunpack.c.h.b16 %v124
    %v240 = vunpack.c.l.b16 %v125
    %v241 = vunpack.c.h.b16 %v125
    %v242 = vunpack.c.l.b16 %v126
    %v243 = vunpack.c.h.b16 %v126
    %v244 = vunpack.c.l.b16 %v127
    %v245 = vunpack.c.h.b16 %v127
    %v246 = vpack.c.b16 %v186, %v182
    %v247 = vpack.c.b16 %v187, %v183
    %v248 = vpack.c.b16 %v188, %v184
    %v249 = vpack.c.b16 %v189, %v185
    %v250 = vpack.c.b16 %v194, %v190
    %v251 = vpack.c.b16 %v195, %v191
    %v252 = vpack.c.b16 %v196, %v192
    %v253 = vpack.c.b16 %v197, %v193
    %v254 = vpack.c.b16 %v202, %v198
    %v255 = vpack.c.b16 %v203, %v199
    %v256 = vpack.c.b16 %v204, %v200
    %v257 = vpack.c.b16 %v205, %v201
    %v258 = vpack.c.b16 %v210, %v206
    %v259 = vpack.c.b16 %v211, %v207
    %v260 = vpack.c.b16 %v212, %v208
    %v261 = vpack.c.b16 %v213, %v209
    %v262 = vpack.c.b16 %v218, %v214
    %v263 = vpack.c.b16 %v219, %v215
    %v264 = vpack.c.b16 %v220, %v216
    %v265 = vpack.c.b16 %v221, %v217
    %v266 = vpack.c.b16 %v226, %v222
    %v267 = vpack.c.b16 %v227, %v223
    %v268 = vpack.c.b16 %v228, %v224
    %v269 = vpack.c.b16 %v229, %v225
    %v270 = vpack.c.b16 %v234, %v230
    %v271 = vpack.c.b16 %v235, %v231
    %v272 = vpack.c.b16 %v236, %v232
    %v273 = vpack.c.b16 %v237, %v233
    %v274 = vpack.c.b16 %v242, %v238
    %v275 = vpack.c.b16 %v243, %v239
    %v276 = vpack.c.b16 %v244, %v240
    %v277 = vpack.c.b16 %v245, %v241
    %310 = vmatprep.subr.bf16.mxu0 %v275
    %311 = vmatpush1.bf16.msra.mxu0 %v274
    %312 = vmatprep.subr.bf16.mxu0 %v271
    %313 = vmatpush1.bf16.msra.mxu0 %v270
    %314 = vmatprep.subr.bf16.mxu0 %v267
    %315 = vmatpush1.bf16.msra.mxu0 %v266
    %316 = vmatprep.subr.bf16.mxu0 %v263
    %317 = vmatpush1.bf16.msra.mxu0 %v262
    %318 = vmatprep.subr.bf16.mxu0 %v259
    %319 = vmatpush1.bf16.msra.mxu0 %v258
    %320 = vmatprep.subr.bf16.mxu0 %v255
    %321 = vmatpush1.bf16.msra.mxu0 %v254
    %322 = vmatprep.subr.bf16.mxu0 %v251
    %323 = vmatpush1.bf16.msra.mxu0 %v250
    %324 = vmatprep.subr.bf16.mxu0 %v247
    %325 = vmatpush1.bf16.msra.mxu0 %v246
    %326 = vmatprep.subr.bf16.mxu0 0
    %327 = vmatpush2.bf16.msra.mxu0 0
    %328 = vmatprep.subr.bf16.mxu0 0
    %329 = vmatpush2.bf16.msra.mxu0 0
    %330 = vmatprep.subr.bf16.mxu0 0
    %331 = vmatpush2.bf16.msra.mxu0 0
    %332 = vmatprep.subr.bf16.mxu0 0
    %333 = vmatpush2.bf16.msra.mxu0 0
    %334 = vmatprep.subr.bf16.mxu0 0
    %335 = vmatpush2.bf16.msra.mxu0 0
    %336 = vmatprep.subr.bf16.mxu0 0
    %337 = vmatpush2.bf16.msra.mxu0 0
    %338 = vmatprep.subr.bf16.mxu0 0
    %339 = vmatpush2.bf16.msra.mxu0 0
    %340 = vmatprep.subr.bf16.mxu0 0
    %341 = vmatpush2.bf16.msra.mxu0 0
    %342 = vmatprep.mubr.bf16.mxu0 0
    %343 = vmatmul.mubr.bf16.gmra.mxu0 %v95
    %v344 = vpop.f32.mrf.mxu0
    %v345 = vadd.f32 %v133, %v344
    %v346 = vpop.f32.mrf.mxu0
    %v347 = vadd.f32 %v137, %v346
    %v348 = vpop.f32.mrf.mxu0
    %v349 = vpop.f32.mrf.mxu0
    %350 = vdwg.mxu0
    %351 = vmatprep.subr.bf16.mxu0 %v277
    %352 = vmatpush1.bf16.msra.mxu0 %v276
    %353 = vmatprep.subr.bf16.mxu0 %v273
    %354 = vmatpush1.bf16.msra.mxu0 %v272
    %355 = vmatprep.subr.bf16.mxu0 %v269
    %356 = vmatpush1.bf16.msra.mxu0 %v268
    %357 = vmatprep.subr.bf16.mxu0 %v265
    %358 = vmatpush1.bf16.msra.mxu0 %v264
    %359 = vmatprep.subr.bf16.mxu0 %v261
    %360 = vmatpush1.bf16.msra.mxu0 %v260
    %361 = vmatprep.subr.bf16.mxu0 %v257
    %362 = vmatpush1.bf16.msra.mxu0 %v256
    %363 = vmatprep.subr.bf16.mxu0 %v253
    %364 = vmatpush1.bf16.msra.mxu0 %v252
    %365 = vmatprep.subr.bf16.mxu0 %v249
    %366 = vmatpush1.bf16.msra.mxu0 %v248
    %367 = vmatprep.subr.bf16.mxu0 0
    %368 = vmatpush2.bf16.msra.mxu0 0
    %369 = vmatprep.subr.bf16.mxu0 0
    %370 = vmatpush2.bf16.msra.mxu0 0
    %371 = vmatprep.subr.bf16.mxu0 0
    %372 = vmatpush2.bf16.msra.mxu0 0
    %373 = vmatprep.subr.bf16.mxu0 0
    %374 = vmatpush2.bf16.msra.mxu0 0
    %375 = vmatprep.subr.bf16.mxu0 0
    %376 = vmatpush2.bf16.msra.mxu0 0
    %377 = vmatprep.subr.bf16.mxu0 0
    %378 = vmatpush2.bf16.msra.mxu0 0
    %379 = vmatprep.subr.bf16.mxu0 0
    %380 = vmatpush2.bf16.msra.mxu0 0
    %381 = vmatprep.subr.bf16.mxu0 0
    %382 = vmatpush2.bf16.msra.mxu0 0
    %383 = vmatprep.mubr.bf16.mxu0 0
    %384 = vmatmul.mubr.bf16.gmra.mxu0 %v95
    %v385 = vpop.f32.mrf.mxu0
    %v386 = vadd.f32 %v141, %v385
    %v387 = vpop.f32.mrf.mxu0
    %v388 = vadd.f32 %v145, %v387
    %v389 = vpop.f32.mrf.mxu0
    %v390 = vpop.f32.mrf.mxu0
    %391 = vdwg.mxu0
    %v392 = vmax.f32 %v345, 0.0
    %v393 = vmax.f32 %v347, 0.0
    %v394 = vmax.f32 %v386, 0.0
    %v395 = vmax.f32 %v388, 0.0
    %v396 = vpack.c.bf16 %v392, %v392
    %v397 = vpack.c.bf16 %v393, %v393
    %v398 = vpack.c.bf16 %v394, %v394
    %v399 = vpack.c.bf16 %v395, %v395
    %v400 = vld [vmem:[#allocation8] sm:$0xff]
    %v401 = vld [vmem:[#allocation8 + $0x8] sm:$0xf]
    %v402 = vld [vmem:[#allocation8 + $0xc] sm:$0xff]
    %v403 = vld [vmem:[#allocation8 + $0x14] sm:$0xf]
    %v404 = vld [vmem:[#allocation8 + $0x18] sm:$0xff]
    %v405 = vld [vmem:[#allocation8 + $0x20] sm:$0xf]
    %v406 = vld [vmem:[#allocation8 + $0x24] sm:$0xff]
    %v407 = vld [vmem:[#allocation8 + $0x2c] sm:$0xf]
    %v408 = vld [vmem:[#allocation8 + $0x30] sm:$0xff]
    %v409 = vld [vmem:[#allocation8 + $0x38] sm:$0xf]
    %v410 = vld [vmem:[#allocation8 + $0x3c] sm:$0xff]
    %v411 = vld [vmem:[#allocation8 + $0x44] sm:$0xf]
    %v412 = vld [vmem:[#allocation8 + $0x48] sm:$0xff]
    %v413 = vld [vmem:[#allocation8 + $0x50] sm:$0xf]
    %v414 = vld [vmem:[#allocation8 + $0x54] sm:$0xff]
    %v415 = vld [vmem:[#allocation8 + $0x5c] sm:$0xf]
    %v416 = vld [vmem:[#allocation8 + $0x60] sm:$0xff]
    %v417 = vld [vmem:[#allocation8 + $0x68] sm:$0xf]
    %v418 = vld [vmem:[#allocation8 + $0x6c] sm:$0xff]
    %v419 = vld [vmem:[#allocation8 + $0x74] sm:$0xf]
    %v420 = vld [vmem:[#allocation8 + $0x78] sm:$0xff]
    %v421 = vld [vmem:[#allocation8 + $0x80] sm:$0xf]
    %v422 = vld [vmem:[#allocation8 + $0x84] sm:$0xff]
    %v423 = vld [vmem:[#allocation8 + $0x8c] sm:$0xf]
    %v424 = vld [vmem:[#allocation8 + $0x90] sm:$0xff]
    %v425 = vld [vmem:[#allocation8 + $0x98] sm:$0xf]
    %v426 = vld [vmem:[#allocation8 + $0x9c] sm:$0xff]
    %v427 = vld [vmem:[#allocation8 + $0xa4] sm:$0xf]
    %v428 = vld [vmem:[#allocation8 + $0xa8] sm:$0xff]
    %v429 = vld [vmem:[#allocation8 + $0xb0] sm:$0xf]
    %v430 = vld [vmem:[#allocation8 + $0xb4] sm:$0xff]
    %v431 = vld [vmem:[#allocation8 + $0xbc] sm:$0xf]
    %v432 = vld [vmem:[#allocation8 + $0xc0] sm:$0xff]
    %v433 = vld [vmem:[#allocation8 + $0xc8] sm:$0xf]
    %v434 = vld [vmem:[#allocation8 + $0xcc] sm:$0xff]
    %v435 = vld [vmem:[#allocation8 + $0xd4] sm:$0xf]
    %v436 = vld [vmem:[#allocation8 + $0xd8] sm:$0xff]
    %v437 = vld [vmem:[#allocation8 + $0xe0] sm:$0xf]
    %v438 = vld [vmem:[#allocation8 + $0xe4] sm:$0xff]
    %v439 = vld [vmem:[#allocation8 + $0xec] sm:$0xf]
    %v440 = vld [vmem:[#allocation8 + $0xf0] sm:$0xff]
    %v441 = vld [vmem:[#allocation8 + $0xf8] sm:$0xf]
    %v442 = vld [vmem:[#allocation8 + $0xfc] sm:$0xff]
    %v443 = vld [vmem:[#allocation8 + $0x104] sm:$0xf]
    %v444 = vld [vmem:[#allocation8 + $0x108] sm:$0xff]
    %v445 = vld [vmem:[#allocation8 + $0x110] sm:$0xf]
    %v446 = vld [vmem:[#allocation8 + $0x114] sm:$0xff]
    %v447 = vld [vmem:[#allocation8 + $0x11c] sm:$0xf]
    %v448 = vld [vmem:[#allocation8 + $0x120] sm:$0xff]
    %v449 = vld [vmem:[#allocation8 + $0x128] sm:$0xf]
    %v450 = vld [vmem:[#allocation8 + $0x12c] sm:$0xff]
    %v451 = vld [vmem:[#allocation8 + $0x134] sm:$0xf]
    %v452 = vld [vmem:[#allocation8 + $0x138] sm:$0xff]
    %v453 = vld [vmem:[#allocation8 + $0x140] sm:$0xf]
    %v454 = vld [vmem:[#allocation8 + $0x144] sm:$0xff]
    %v455 = vld [vmem:[#allocation8 + $0x14c] sm:$0xf]
    %v456 = vld [vmem:[#allocation8 + $0x150] sm:$0xff]
    %v457 = vld [vmem:[#allocation8 + $0x158] sm:$0xf]
    %v458 = vld [vmem:[#allocation8 + $0x15c] sm:$0xff]
    %v459 = vld [vmem:[#allocation8 + $0x164] sm:$0xf]
    %v460 = vld [vmem:[#allocation8 + $0x168] sm:$0xff]
    %v461 = vld [vmem:[#allocation8 + $0x170] sm:$0xf]
    %v462 = vld [vmem:[#allocation8 + $0x174] sm:$0xff]
    %v463 = vld [vmem:[#allocation8 + $0x17c] sm:$0xf]
    %v464 = vld [vmem:[#allocation8 + $0x180] sm:$0xff]
    %v465 = vld [vmem:[#allocation8 + $0x188] sm:$0xf]
    %v466 = vld [vmem:[#allocation8 + $0x18c] sm:$0xff]
    %v467 = vld [vmem:[#allocation8 + $0x194] sm:$0xf]
    %v468 = vld [vmem:[#allocation8 + $0x198] sm:$0xff]
    %v469 = vld [vmem:[#allocation8 + $0x1a0] sm:$0xf]
    %v470 = vld [vmem:[#allocation8 + $0x1a4] sm:$0xff]
    %v471 = vld [vmem:[#allocation8 + $0x1ac] sm:$0xf]
    %v472 = vld [vmem:[#allocation8 + $0x1b0] sm:$0xff]
    %v473 = vld [vmem:[#allocation8 + $0x1b8] sm:$0xf]
    %v474 = vld [vmem:[#allocation8 + $0x1bc] sm:$0xff]
    %v475 = vld [vmem:[#allocation8 + $0x1c4] sm:$0xf]
    %v476 = vld [vmem:[#allocation8 + $0x1c8] sm:$0xff]
    %v477 = vld [vmem:[#allocation8 + $0x1d0] sm:$0xf]
    %v478 = vld [vmem:[#allocation8 + $0x1d4] sm:$0xff]
    %v479 = vld [vmem:[#allocation8 + $0x1dc] sm:$0xf]
    %v480 = vld [vmem:[#allocation8 + $0x1e0] sm:$0xff]
    %v481 = vld [vmem:[#allocation8 + $0x1e8] sm:$0xf]
    %v482 = vld [vmem:[#allocation8 + $0x1ec] sm:$0xff]
    %v483 = vld [vmem:[#allocation8 + $0x1f4] sm:$0xf]
    %v484 = vld [vmem:[#allocation8 + $0x1f8] sm:$0xff]
    %v485 = vld [vmem:[#allocation8 + $0x200] sm:$0xf]
    %v486 = vld [vmem:[#allocation8 + $0x204] sm:$0xff]
    %v487 = vld [vmem:[#allocation8 + $0x20c] sm:$0xf]
    %v488 = vld [vmem:[#allocation8 + $0x210] sm:$0xff]
    %v489 = vld [vmem:[#allocation8 + $0x218] sm:$0xf]
    %v490 = vld [vmem:[#allocation8 + $0x21c] sm:$0xff]
    %v491 = vld [vmem:[#allocation8 + $0x224] sm:$0xf]
    %v492 = vld [vmem:[#allocation8 + $0x228] sm:$0xff]
    %v493 = vld [vmem:[#allocation8 + $0x230] sm:$0xf]
    %v494 = vld [vmem:[#allocation8 + $0x234] sm:$0xff]
    %v495 = vld [vmem:[#allocation8 + $0x23c] sm:$0xf]
    %v496 = vld [vmem:[#allocation8 + $0x240] sm:$0xff]
    %v497 = vld [vmem:[#allocation8 + $0x248] sm:$0xf]
    %v498 = vld [vmem:[#allocation8 + $0x24c] sm:$0xff]
    %v499 = vld [vmem:[#allocation8 + $0x254] sm:$0xf]
    %v500 = vld [vmem:[#allocation8 + $0x258] sm:$0xff]
    %v501 = vld [vmem:[#allocation8 + $0x260] sm:$0xf]
    %v502 = vld [vmem:[#allocation8 + $0x264] sm:$0xff]
    %v503 = vld [vmem:[#allocation8 + $0x26c] sm:$0xf]
    %v504 = vld [vmem:[#allocation8 + $0x270] sm:$0xff]
    %v505 = vld [vmem:[#allocation8 + $0x278] sm:$0xf]
    %v506 = vld [vmem:[#allocation8 + $0x27c] sm:$0xff]
    %v507 = vld [vmem:[#allocation8 + $0x284] sm:$0xf]
    %v508 = vld [vmem:[#allocation8 + $0x288] sm:$0xff]
    %v509 = vld [vmem:[#allocation8 + $0x290] sm:$0xf]
    %v510 = vld [vmem:[#allocation8 + $0x294] sm:$0xff]
    %v511 = vld [vmem:[#allocation8 + $0x29c] sm:$0xf]
    %v512 = vld [vmem:[#allocation8 + $0x2a0] sm:$0xff]
    %v513 = vld [vmem:[#allocation8 + $0x2a8] sm:$0xf]
    %v514 = vld [vmem:[#allocation8 + $0x2ac] sm:$0xff]
    %v515 = vld [vmem:[#allocation8 + $0x2b4] sm:$0xf]
    %v516 = vld [vmem:[#allocation8 + $0x2b8] sm:$0xff]
    %v517 = vld [vmem:[#allocation8 + $0x2c0] sm:$0xf]
    %v518 = vld [vmem:[#allocation8 + $0x2c4] sm:$0xff]
    %v519 = vld [vmem:[#allocation8 + $0x2cc] sm:$0xf]
    %v520 = vld [vmem:[#allocation8 + $0x2d0] sm:$0xff]
    %v521 = vld [vmem:[#allocation8 + $0x2d8] sm:$0xf]
    %v522 = vld [vmem:[#allocation8 + $0x2dc] sm:$0xff]
    %v523 = vld [vmem:[#allocation8 + $0x2e4] sm:$0xf]
    %v524 = vld [vmem:[#allocation8 + $0x2e8] sm:$0xff]
    %v525 = vld [vmem:[#allocation8 + $0x2f0] sm:$0xf]
    %v526 = vld [vmem:[#allocation8 + $0x2f4] sm:$0xff]
    %v527 = vld [vmem:[#allocation8 + $0x2fc] sm:$0xf]
    %v528 = vld [vmem:[%s4] sm:$0x7]
    %v530 = vlaneseq
    %v531 = vshrl.u32 %v530, 7
    %v532 = vsub.s32 0, %v531
    %v533 = vrot.slane %v528, %v532
    %v534 = vlaneseq
    %v535 = vshrl.u32 %v534, 7
    %v536 = vsub.s32 1, %v535
    %v537 = vrot.slane %v528, %v536
    %v538 = vlaneseq
    %v539 = vshrl.u32 %v538, 7
    %v540 = vsub.s32 2, %v539
    %v541 = vrot.slane %v528, %v540
    %v673 = vunpack.c.l.b16 %v400
    %v674 = vunpack.c.h.b16 %v400
    %v675 = vunpack.c.l.b16 %v401
    %v676 = vunpack.c.l.b16 %v402
    %v677 = vunpack.c.h.b16 %v402
    %v678 = vunpack.c.l.b16 %v403
    %v679 = vunpack.c.l.b16 %v404
    %v680 = vunpack.c.h.b16 %v404
    %v681 = vunpack.c.l.b16 %v405
    %v682 = vunpack.c.l.b16 %v406
    %v683 = vunpack.c.h.b16 %v406
    %v684 = vunpack.c.l.b16 %v407
    %v685 = vunpack.c.l.b16 %v408
    %v686 = vunpack.c.h.b16 %v408
    %v687 = vunpack.c.l.b16 %v409
    %v688 = vunpack.c.l.b16 %v410
    %v689 = vunpack.c.h.b16 %v410
    %v690 = vunpack.c.l.b16 %v411
    %v691 = vunpack.c.l.b16 %v412
    %v692 = vunpack.c.h.b16 %v412
    %v693 = vunpack.c.l.b16 %v413
    %v694 = vunpack.c.l.b16 %v414
    %v695 = vunpack.c.h.b16 %v414
    %v696 = vunpack.c.l.b16 %v415
    %v697 = vunpack.c.l.b16 %v416
    %v698 = vunpack.c.h.b16 %v416
    %v699 = vunpack.c.l.b16 %v417
    %v700 = vunpack.c.l.b16 %v418
    %v701 = vunpack.c.h.b16 %v418
    %v702 = vunpack.c.l.b16 %v419
    %v703 = vunpack.c.l.b16 %v420
    %v704 = vunpack.c.h.b16 %v420
    %v705 = vunpack.c.l.b16 %v421
    %v706 = vunpack.c.l.b16 %v422
    %v707 = vunpack.c.h.b16 %v422
    %v708 = vunpack.c.l.b16 %v423
    %v709 = vunpack.c.l.b16 %v424
    %v710 = vunpack.c.h.b16 %v424
    %v711 = vunpack.c.l.b16 %v425
    %v712 = vunpack.c.l.b16 %v426
    %v713 = vunpack.c.h.b16 %v426
    %v714 = vunpack.c.l.b16 %v427
    %v715 = vunpack.c.l.b16 %v428
    %v716 = vunpack.c.h.b16 %v428
    %v717 = vunpack.c.l.b16 %v429
    %v718 = vunpack.c.l.b16 %v430
    %v719 = vunpack.c.h.b16 %v430
    %v720 = vunpack.c.l.b16 %v431
    %v721 = vunpack.c.l.b16 %v432
    %v722 = vunpack.c.h.b16 %v432
    %v723 = vunpack.c.l.b16 %v433
    %v724 = vunpack.c.l.b16 %v434
    %v725 = vunpack.c.h.b16 %v434
    %v726 = vunpack.c.l.b16 %v435
    %v727 = vunpack.c.l.b16 %v436
    %v728 = vunpack.c.h.b16 %v436
    %v729 = vunpack.c.l.b16 %v437
    %v730 = vunpack.c.l.b16 %v438
    %v731 = vunpack.c.h.b16 %v438
    %v732 = vunpack.c.l.b16 %v439
    %v733 = vunpack.c.l.b16 %v440
    %v734 = vunpack.c.h.b16 %v440
    %v735 = vunpack.c.l.b16 %v441
    %v736 = vunpack.c.l.b16 %v442
    %v737 = vunpack.c.h.b16 %v442
    %v738 = vunpack.c.l.b16 %v443
    %v739 = vunpack.c.l.b16 %v444
    %v740 = vunpack.c.h.b16 %v444
    %v741 = vunpack.c.l.b16 %v445
    %v742 = vunpack.c.l.b16 %v446
    %v743 = vunpack.c.h.b16 %v446
    %v744 = vunpack.c.l.b16 %v447
    %v745 = vunpack.c.l.b16 %v448
    %v746 = vunpack.c.h.b16 %v448
    %v747 = vunpack.c.l.b16 %v449
    %v748 = vunpack.c.l.b16 %v450
    %v749 = vunpack.c.h.b16 %v450
    %v750 = vunpack.c.l.b16 %v451
    %v751 = vunpack.c.l.b16 %v452
    %v752 = vunpack.c.h.b16 %v452
    %v753 = vunpack.c.l.b16 %v453
    %v754 = vunpack.c.l.b16 %v454
    %v755 = vunpack.c.h.b16 %v454
    %v756 = vunpack.c.l.b16 %v455
    %v757 = vunpack.c.l.b16 %v456
    %v758 = vunpack.c.h.b16 %v456
    %v759 = vunpack.c.l.b16 %v457
    %v760 = vunpack.c.l.b16 %v458
    %v761 = vunpack.c.h.b16 %v458
    %v762 = vunpack.c.l.b16 %v459
    %v763 = vunpack.c.l.b16 %v460
    %v764 = vunpack.c.h.b16 %v460
    %v765 = vunpack.c.l.b16 %v461
    %v766 = vunpack.c.l.b16 %v462
    %v767 = vunpack.c.h.b16 %v462
    %v768 = vunpack.c.l.b16 %v463
    %v769 = vunpack.c.l.b16 %v464
    %v770 = vunpack.c.h.b16 %v464
    %v771 = vunpack.c.l.b16 %v465
    %v772 = vunpack.c.l.b16 %v466
    %v773 = vunpack.c.h.b16 %v466
    %v774 = vunpack.c.l.b16 %v467
    %v775 = vunpack.c.l.b16 %v468
    %v776 = vunpack.c.h.b16 %v468
    %v777 = vunpack.c.l.b16 %v469
    %v778 = vunpack.c.l.b16 %v470
    %v779 = vunpack.c.h.b16 %v470
    %v780 = vunpack.c.l.b16 %v471
    %v781 = vunpack.c.l.b16 %v472
    %v782 = vunpack.c.h.b16 %v472
    %v783 = vunpack.c.l.b16 %v473
    %v784 = vunpack.c.l.b16 %v474
    %v785 = vunpack.c.h.b16 %v474
    %v786 = vunpack.c.l.b16 %v475
    %v787 = vunpack.c.l.b16 %v476
    %v788 = vunpack.c.h.b16 %v476
    %v789 = vunpack.c.l.b16 %v477
    %v790 = vunpack.c.l.b16 %v478
    %v791 = vunpack.c.h.b16 %v478
    %v792 = vunpack.c.l.b16 %v479
    %v793 = vunpack.c.l.b16 %v480
    %v794 = vunpack.c.h.b16 %v480
    %v795 = vunpack.c.l.b16 %v481
    %v796 = vunpack.c.l.b16 %v482
    %v797 = vunpack.c.h.b16 %v482
    %v798 = vunpack.c.l.b16 %v483
    %v799 = vunpack.c.l.b16 %v484
    %v800 = vunpack.c.h.b16 %v484
    %v801 = vunpack.c.l.b16 %v485
    %v802 = vunpack.c.l.b16 %v486
    %v803 = vunpack.c.h.b16 %v486
    %v804 = vunpack.c.l.b16 %v487
    %v805 = vunpack.c.l.b16 %v488
    %v806 = vunpack.c.h.b16 %v488
    %v807 = vunpack.c.l.b16 %v489
    %v808 = vunpack.c.l.b16 %v490
    %v809 = vunpack.c.h.b16 %v490
    %v810 = vunpack.c.l.b16 %v491
    %v811 = vunpack.c.l.b16 %v492
    %v812 = vunpack.c.h.b16 %v492
    %v813 = vunpack.c.l.b16 %v493
    %v814 = vunpack.c.l.b16 %v494
    %v815 = vunpack.c.h.b16 %v494
    %v816 = vunpack.c.l.b16 %v495
    %v817 = vunpack.c.l.b16 %v496
    %v818 = vunpack.c.h.b16 %v496
    %v819 = vunpack.c.l.b16 %v497
    %v820 = vunpack.c.l.b16 %v498
    %v821 = vunpack.c.h.b16 %v498
    %v822 = vunpack.c.l.b16 %v499
    %v823 = vunpack.c.l.b16 %v500
    %v824 = vunpack.c.h.b16 %v500
    %v825 = vunpack.c.l.b16 %v501
    %v826 = vunpack.c.l.b16 %v502
    %v827 = vunpack.c.h.b16 %v502
    %v828 = vunpack.c.l.b16 %v503
    %v829 = vunpack.c.l.b16 %v504
    %v830 = vunpack.c.h.b16 %v504
    %v831 = vunpack.c.l.b16 %v505
    %v832 = vunpack.c.l.b16 %v506
    %v833 = vunpack.c.h.b16 %v506
    %v834 = vunpack.c.l.b16 %v507
    %v835 = vunpack.c.l.b16 %v508
    %v836 = vunpack.c.h.b16 %v508
    %v837 = vunpack.c.l.b16 %v509
    %v838 = vunpack.c.l.b16 %v510
    %v839 = vunpack.c.h.b16 %v510
    %v840 = vunpack.c.l.b16 %v511
    %v841 = vunpack.c.l.b16 %v512
    %v842 = vunpack.c.h.b16 %v512
    %v843 = vunpack.c.l.b16 %v513
    %v844 = vunpack.c.l.b16 %v514
    %v845 = vunpack.c.h.b16 %v514
    %v846 = vunpack.c.l.b16 %v515
    %v847 = vunpack.c.l.b16 %v516
    %v848 = vunpack.c.h.b16 %v516
    %v849 = vunpack.c.l.b16 %v517
    %v850 = vunpack.c.l.b16 %v518
    %v851 = vunpack.c.h.b16 %v518
    %v852 = vunpack.c.l.b16 %v519
    %v853 = vunpack.c.l.b16 %v520
    %v854 = vunpack.c.h.b16 %v520
    %v855 = vunpack.c.l.b16 %v521
    %v856 = vunpack.c.l.b16 %v522
    %v857 = vunpack.c.h.b16 %v522
    %v858 = vunpack.c.l.b16 %v523
    %v859 = vunpack.c.l.b16 %v524
    %v860 = vunpack.c.h.b16 %v524
    %v861 = vunpack.c.l.b16 %v525
    %v862 = vunpack.c.l.b16 %v526
    %v863 = vunpack.c.h.b16 %v526
    %v864 = vunpack.c.l.b16 %v527
    %v865 = vpack.c.b16 %v676, %v673
    %v866 = vpack.c.b16 %v677, %v674
    %v867 = vpack.c.b16 %v678, %v675
    %v868 = vpack.c.b16 %v682, %v679
    %v869 = vpack.c.b16 %v683, %v680
    %v870 = vpack.c.b16 %v684, %v681
    %v871 = vpack.c.b16 %v688, %v685
    %v872 = vpack.c.b16 %v689, %v686
    %v873 = vpack.c.b16 %v690, %v687
    %v874 = vpack.c.b16 %v694, %v691
    %v875 = vpack.c.b16 %v695, %v692
    %v876 = vpack.c.b16 %v696, %v693
    %v877 = vpack.c.b16 %v700, %v697
    %v878 = vpack.c.b16 %v701, %v698
    %v879 = vpack.c.b16 %v702, %v699
    %v880 = vpack.c.b16 %v706, %v703
    %v881 = vpack.c.b16 %v707, %v704
    %v882 = vpack.c.b16 %v708, %v705
    %v883 = vpack.c.b16 %v712, %v709
    %v884 = vpack.c.b16 %v713, %v710
    %v885 = vpack.c.b16 %v714, %v711
    %v886 = vpack.c.b16 %v718, %v715
    %v887 = vpack.c.b16 %v719, %v716
    %v888 = vpack.c.b16 %v720, %v717
    %v889 = vpack.c.b16 %v724, %v721
    %v890 = vpack.c.b16 %v725, %v722
    %v891 = vpack.c.b16 %v726, %v723
    %v892 = vpack.c.b16 %v730, %v727
    %v893 = vpack.c.b16 %v731, %v728
    %v894 = vpack.c.b16 %v732, %v729
    %v895 = vpack.c.b16 %v736, %v733
    %v896 = vpack.c.b16 %v737, %v734
    %v897 = vpack.c.b16 %v738, %v735
    %v898 = vpack.c.b16 %v742, %v739
    %v899 = vpack.c.b16 %v743, %v740
    %v900 = vpack.c.b16 %v744, %v741
    %v901 = vpack.c.b16 %v748, %v745
    %v902 = vpack.c.b16 %v749, %v746
    %v903 = vpack.c.b16 %v750, %v747
    %v904 = vpack.c.b16 %v754, %v751
    %v905 = vpack.c.b16 %v755, %v752
    %v906 = vpack.c.b16 %v756, %v753
    %v907 = vpack.c.b16 %v760, %v757
    %v908 = vpack.c.b16 %v761, %v758
    %v909 = vpack.c.b16 %v762, %v759
    %v910 = vpack.c.b16 %v766, %v763
    %v911 = vpack.c.b16 %v767, %v764
    %v912 = vpack.c.b16 %v768, %v765
    %v913 = vpack.c.b16 %v772, %v769
    %v914 = vpack.c.b16 %v773, %v770
    %v915 = vpack.c.b16 %v774, %v771
    %v916 = vpack.c.b16 %v778, %v775
    %v917 = vpack.c.b16 %v779, %v776
    %v918 = vpack.c.b16 %v780, %v777
    %v919 = vpack.c.b16 %v784, %v781
    %v920 = vpack.c.b16 %v785, %v782
    %v921 = vpack.c.b16 %v786, %v783
    %v922 = vpack.c.b16 %v790, %v787
    %v923 = vpack.c.b16 %v791, %v788
    %v924 = vpack.c.b16 %v792, %v789
    %v925 = vpack.c.b16 %v796, %v793
    %v926 = vpack.c.b16 %v797, %v794
    %v927 = vpack.c.b16 %v798, %v795
    %v928 = vpack.c.b16 %v802, %v799
    %v929 = vpack.c.b16 %v803, %v800
    %v930 = vpack.c.b16 %v804, %v801
    %v931 = vpack.c.b16 %v808, %v805
    %v932 = vpack.c.b16 %v809, %v806
    %v933 = vpack.c.b16 %v810, %v807
    %v934 = vpack.c.b16 %v814, %v811
    %v935 = vpack.c.b16 %v815, %v812
    %v936 = vpack.c.b16 %v816, %v813
    %v937 = vpack.c.b16 %v820, %v817
    %v938 = vpack.c.b16 %v821, %v818
    %v939 = vpack.c.b16 %v822, %v819
    %v940 = vpack.c.b16 %v826, %v823
    %v941 = vpack.c.b16 %v827, %v824
    %v942 = vpack.c.b16 %v828, %v825
    %v943 = vpack.c.b16 %v832, %v829
    %v944 = vpack.c.b16 %v833, %v830
    %v945 = vpack.c.b16 %v834, %v831
    %v946 = vpack.c.b16 %v838, %v835
    %v947 = vpack.c.b16 %v839, %v836
    %v948 = vpack.c.b16 %v840, %v837
    %v949 = vpack.c.b16 %v844, %v841
    %v950 = vpack.c.b16 %v845, %v842
    %v951 = vpack.c.b16 %v846, %v843
    %v952 = vpack.c.b16 %v850, %v847
    %v953 = vpack.c.b16 %v851, %v848
    %v954 = vpack.c.b16 %v852, %v849
    %v955 = vpack.c.b16 %v856, %v853
    %v956 = vpack.c.b16 %v857, %v854
    %v957 = vpack.c.b16 %v858, %v855
    %v958 = vpack.c.b16 %v862, %v859
    %v959 = vpack.c.b16 %v863, %v860
    %v960 = vpack.c.b16 %v864, %v861
    %1057 = vmatprep.subr.bf16.mxu0 %v887
    %1058 = vmatpush1.bf16.msra.mxu0 %v886
    %1059 = vmatprep.subr.bf16.mxu0 %v884
    %1060 = vmatpush1.bf16.msra.mxu0 %v883
    %1061 = vmatprep.subr.bf16.mxu0 %v881
    %1062 = vmatpush1.bf16.msra.mxu0 %v880
    %1063 = vmatprep.subr.bf16.mxu0 %v878
    %1064 = vmatpush1.bf16.msra.mxu0 %v877
    %1065 = vmatprep.subr.bf16.mxu0 %v875
    %1066 = vmatpush1.bf16.msra.mxu0 %v874
    %1067 = vmatprep.subr.bf16.mxu0 %v872
    %1068 = vmatpush1.bf16.msra.mxu0 %v871
    %1069 = vmatprep.subr.bf16.mxu0 %v869
    %1070 = vmatpush1.bf16.msra.mxu0 %v868
    %1071 = vmatprep.subr.bf16.mxu0 %v866
    %1072 = vmatpush1.bf16.msra.mxu0 %v865
    %1073 = vmatprep.subr.bf16.mxu0 %v911
    %1074 = vmatpush2.bf16.msra.mxu0 %v910
    %1075 = vmatprep.subr.bf16.mxu0 %v908
    %1076 = vmatpush2.bf16.msra.mxu0 %v907
    %1077 = vmatprep.subr.bf16.mxu0 %v905
    %1078 = vmatpush2.bf16.msra.mxu0 %v904
    %1079 = vmatprep.subr.bf16.mxu0 %v902
    %1080 = vmatpush2.bf16.msra.mxu0 %v901
    %1081 = vmatprep.subr.bf16.mxu0 %v899
    %1082 = vmatpush2.bf16.msra.mxu0 %v898
    %1083 = vmatprep.subr.bf16.mxu0 %v896
    %1084 = vmatpush2.bf16.msra.mxu0 %v895
    %1085 = vmatprep.subr.bf16.mxu0 %v893
    %1086 = vmatpush2.bf16.msra.mxu0 %v892
    %1087 = vmatprep.subr.bf16.mxu0 %v890
    %1088 = vmatpush2.bf16.msra.mxu0 %v889
    %1089 = vmatprep.mubr.bf16.mxu0 %v397
    %1090 = vmatmul.mubr.bf16.gmra.mxu0 %v396
    %v1091 = vpop.f32.mrf.mxu0
    %v1092 = vadd.f32 %v533, %v1091
    %v1093 = vpop.f32.mrf.mxu0
    %v1094 = vadd.f32 %v537, %v1093
    %v1095 = vpop.f32.mrf.mxu0
    %v1096 = vpop.f32.mrf.mxu0
    %1097 = vdwg.mxu0
    %1098 = vmatprep.subr.bf16.mxu0 %v935
    %1099 = vmatpush1.bf16.msra.mxu0 %v934
    %1100 = vmatprep.subr.bf16.mxu0 %v932
    %1101 = vmatpush1.bf16.msra.mxu0 %v931
    %1102 = vmatprep.subr.bf16.mxu0 %v929
    %1103 = vmatpush1.bf16.msra.mxu0 %v928
    %1104 = vmatprep.subr.bf16.mxu0 %v926
    %1105 = vmatpush1.bf16.msra.mxu0 %v925
    %1106 = vmatprep.subr.bf16.mxu0 %v923
    %1107 = vmatpush1.bf16.msra.mxu0 %v922
    %1108 = vmatprep.subr.bf16.mxu0 %v920
    %1109 = vmatpush1.bf16.msra.mxu0 %v919
    %1110 = vmatprep.subr.bf16.mxu0 %v917
    %1111 = vmatpush1.bf16.msra.mxu0 %v916
    %1112 = vmatprep.subr.bf16.mxu0 %v914
    %1113 = vmatpush1.bf16.msra.mxu0 %v913
    %1114 = vmatprep.subr.bf16.mxu0 %v959
    %1115 = vmatpush2.bf16.msra.mxu0 %v958
    %1116 = vmatprep.subr.bf16.mxu0 %v956
    %1117 = vmatpush2.bf16.msra.mxu0 %v955
    %1118 = vmatprep.subr.bf16.mxu0 %v953
    %1119 = vmatpush2.bf16.msra.mxu0 %v952
    %1120 = vmatprep.subr.bf16.mxu0 %v950
    %1121 = vmatpush2.bf16.msra.mxu0 %v949
    %1122 = vmatprep.subr.bf16.mxu0 %v947
    %1123 = vmatpush2.bf16.msra.mxu0 %v946
    %1124 = vmatprep.subr.bf16.mxu0 %v944
    %1125 = vmatpush2.bf16.msra.mxu0 %v943
    %1126 = vmatprep.subr.bf16.mxu0 %v941
    %1127 = vmatpush2.bf16.msra.mxu0 %v940
    %1128 = vmatprep.subr.bf16.mxu0 %v938
    %1129 = vmatpush2.bf16.msra.mxu0 %v937
    %1130 = vmatprep.mubr.bf16.mxu0 %v399
    %1131 = vmatmul.mubr.bf16.gmra.mxu0 %v398
    %v1132 = vpop.f32.mrf.mxu0
    %v1133 = vadd.f32 %v1092, %v1132
    %v1134 = vpop.f32.mrf.mxu0
    %v1135 = vadd.f32 %v1094, %v1134
    %v1136 = vpop.f32.mrf.mxu0
    %v1137 = vpop.f32.mrf.mxu0
    %1138 = vdwg.mxu0
    %1139 = vmatprep.subr.bf16.mxu0 0
    %1140 = vmatpush1.bf16.msra.mxu0 %v888
    %1141 = vmatprep.subr.bf16.mxu0 0
    %1142 = vmatpush1.bf16.msra.mxu0 %v885
    %1143 = vmatprep.subr.bf16.mxu0 0
    %1144 = vmatpush1.bf16.msra.mxu0 %v882
    %1145 = vmatprep.subr.bf16.mxu0 0
    %1146 = vmatpush1.bf16.msra.mxu0 %v879
    %1147 = vmatprep.subr.bf16.mxu0 0
    %1148 = vmatpush1.bf16.msra.mxu0 %v876
    %1149 = vmatprep.subr.bf16.mxu0 0
    %1150 = vmatpush1.bf16.msra.mxu0 %v873
    %1151 = vmatprep.subr.bf16.mxu0 0
    %1152 = vmatpush1.bf16.msra.mxu0 %v870
    %1153 = vmatprep.subr.bf16.mxu0 0
    %1154 = vmatpush1.bf16.msra.mxu0 %v867
    %1155 = vmatprep.subr.bf16.mxu0 0
    %1156 = vmatpush2.bf16.msra.mxu0 %v912
    %1157 = vmatprep.subr.bf16.mxu0 0
    %1158 = vmatpush2.bf16.msra.mxu0 %v909
    %1159 = vmatprep.subr.bf16.mxu0 0
    %1160 = vmatpush2.bf16.msra.mxu0 %v906
    %1161 = vmatprep.subr.bf16.mxu0 0
    %1162 = vmatpush2.bf16.msra.mxu0 %v903
    %1163 = vmatprep.subr.bf16.mxu0 0
    %1164 = vmatpush2.bf16.msra.mxu0 %v900
    %1165 = vmatprep.subr.bf16.mxu0 0
    %1166 = vmatpush2.bf16.msra.mxu0 %v897
    %1167 = vmatprep.subr.bf16.mxu0 0
    %1168 = vmatpush2.bf16.msra.mxu0 %v894
    %1169 = vmatprep.subr.bf16.mxu0 0
    %1170 = vmatpush2.bf16.msra.mxu0 %v891
    %1171 = vmatprep.mubr.bf16.mxu0 %v397
    %1172 = vmatmul.mubr.bf16.gmra.mxu0 %v396
    %v1173 = vpop.f32.mrf.mxu0
    %v1174 = vadd.f32 %v541, %v1173
    %v1175 = vpop.f32.mrf.mxu0
    %v1176 = vpop.f32.mrf.mxu0
    %v1177 = vpop.f32.mrf.mxu0
    %1178 = vdwg.mxu0
    %1179 = vmatprep.subr.bf16.mxu0 0
    %1180 = vmatpush1.bf16.msra.mxu0 %v936
    %1181 = vmatprep.subr.bf16.mxu0 0
    %1182 = vmatpush1.bf16.msra.mxu0 %v933
    %1183 = vmatprep.subr.bf16.mxu0 0
    %1184 = vmatpush1.bf16.msra.mxu0 %v930
    %1185 = vmatprep.subr.bf16.mxu0 0
    %1186 = vmatpush1.bf16.msra.mxu0 %v927
    %1187 = vmatprep.subr.bf16.mxu0 0
    %1188 = vmatpush1.bf16.msra.mxu0 %v924
    %1189 = vmatprep.subr.bf16.mxu0 0
    %1190 = vmatpush1.bf16.msra.mxu0 %v921
    %1191 = vmatprep.subr.bf16.mxu0 0
    %1192 = vmatpush1.bf16.msra.mxu0 %v918
    %1193 = vmatprep.subr.bf16.mxu0 0
    %1194 = vmatpush1.bf16.msra.mxu0 %v915
    %1195 = vmatprep.subr.bf16.mxu0 0
    %1196 = vmatpush2.bf16.msra.mxu0 %v960
    %1197 = vmatprep.subr.bf16.mxu0 0
    %1198 = vmatpush2.bf16.msra.mxu0 %v957
    %1199 = vmatprep.subr.bf16.mxu0 0
    %1200 = vmatpush2.bf16.msra.mxu0 %v954
    %1201 = vmatprep.subr.bf16.mxu0 0
    %1202 = vmatpush2.bf16.msra.mxu0 %v951
    %1203 = vmatprep.subr.bf16.mxu0 0
    %1204 = vmatpush2.bf16.msra.mxu0 %v948
    %1205 = vmatprep.subr.bf16.mxu0 0
    %1206 = vmatpush2.bf16.msra.mxu0 %v945
    %1207 = vmatprep.subr.bf16.mxu0 0
    %1208 = vmatpush2.bf16.msra.mxu0 %v942
    %1209 = vmatprep.subr.bf16.mxu0 0
    %1210 = vmatpush2.bf16.msra.mxu0 %v939
    %1211 = vmatprep.mubr.bf16.mxu0 %v399
    %1212 = vmatmul.mubr.bf16.gmra.mxu0 %v398
    %v1213 = vpop.f32.mrf.mxu0
    %v1214 = vadd.f32 %v1174, %v1213
    %v1215 = vpop.f32.mrf.mxu0
    %v1216 = vpop.f32.mrf.mxu0
    %v1217 = vpop.f32.mrf.mxu0
    %1218 = vdwg.mxu0
    %v1219 = vmax.f32 %v1133, 0.0
    %v1220 = vmax.f32 %v1135, 0.0
    %v1221 = vmax.f32 %v1214, 0.0
    %v1222 = vpack.c.bf16 %v1219, %v1219
    %v1223 = vpack.c.bf16 %v1220, %v1220
    %v1224 = vpack.c.bf16 %v1221, %v1221
    %v1225 = vld [vmem:[#allocation10] sm:$0xff]
    %v1226 = vld [vmem:[#allocation10 + $0x8] sm:$0xff]
    %v1227 = vld [vmem:[#allocation10 + $0x10] sm:$0xff]
    %v1228 = vld [vmem:[#allocation10 + $0x18] sm:$0xff]
    %v1229 = vld [vmem:[#allocation10 + $0x20] sm:$0xff]
    %v1230 = vld [vmem:[#allocation10 + $0x28] sm:$0xff]
    %v1231 = vld [vmem:[#allocation10 + $0x30] sm:$0xff]
    %v1232 = vld [vmem:[#allocation10 + $0x38] sm:$0xff]
    %v1233 = vld [vmem:[#allocation10 + $0x40] sm:$0xff]
    %v1234 = vld [vmem:[#allocation10 + $0x48] sm:$0xff]
    %v1235 = vld [vmem:[#allocation10 + $0x50] sm:$0xff]
    %v1236 = vld [vmem:[#allocation10 + $0x58] sm:$0xff]
    %v1237 = vld [vmem:[#allocation10 + $0x60] sm:$0xff]
    %v1238 = vld [vmem:[#allocation10 + $0x68] sm:$0xff]
    %v1239 = vld [vmem:[#allocation10 + $0x70] sm:$0xff]
    %v1240 = vld [vmem:[#allocation10 + $0x78] sm:$0xff]
    %v1241 = vld [vmem:[#allocation10 + $0x80] sm:$0xff]
    %v1242 = vld [vmem:[#allocation10 + $0x88] sm:$0xff]
    %v1243 = vld [vmem:[#allocation10 + $0x90] sm:$0xff]
    %v1244 = vld [vmem:[#allocation10 + $0x98] sm:$0xff]
    %v1245 = vld [vmem:[#allocation10 + $0xa0] sm:$0xff]
    %v1246 = vld [vmem:[#allocation10 + $0xa8] sm:$0xff]
    %v1247 = vld [vmem:[#allocation10 + $0xb0] sm:$0xff]
    %v1248 = vld [vmem:[#allocation10 + $0xb8] sm:$0xff]
    %v1249 = vld [vmem:[#allocation10 + $0xc0] sm:$0xff]
    %v1250 = vld [vmem:[#allocation10 + $0xc8] sm:$0xff]
    %v1251 = vld [vmem:[#allocation10 + $0xd0] sm:$0xff]
    %v1252 = vld [vmem:[#allocation10 + $0xd8] sm:$0xff]
    %v1253 = vld [vmem:[#allocation10 + $0xe0] sm:$0xff]
    %v1254 = vld [vmem:[#allocation10 + $0xe8] sm:$0xff]
    %v1255 = vld [vmem:[#allocation10 + $0xf0] sm:$0xff]
    %v1256 = vld [vmem:[#allocation10 + $0xf8] sm:$0xff]
    %v1257 = vld [vmem:[#allocation10 + $0x100] sm:$0xff]
    %v1258 = vld [vmem:[#allocation10 + $0x108] sm:$0xff]
    %v1259 = vld [vmem:[#allocation10 + $0x110] sm:$0xff]
    %v1260 = vld [vmem:[#allocation10 + $0x118] sm:$0xff]
    %v1261 = vld [vmem:[#allocation10 + $0x120] sm:$0xff]
    %v1262 = vld [vmem:[#allocation10 + $0x128] sm:$0xff]
    %v1263 = vld [vmem:[#allocation10 + $0x130] sm:$0xff]
    %v1264 = vld [vmem:[#allocation10 + $0x138] sm:$0xff]
    %v1265 = vld [vmem:[#allocation10 + $0x140] sm:$0xff]
    %v1266 = vld [vmem:[#allocation10 + $0x148] sm:$0xff]
    %v1267 = vld [vmem:[#allocation10 + $0x150] sm:$0xff]
    %v1268 = vld [vmem:[#allocation10 + $0x158] sm:$0xff]
    %v1269 = vld [vmem:[#allocation10 + $0x160] sm:$0xff]
    %v1270 = vld [vmem:[#allocation10 + $0x168] sm:$0xff]
    %v1271 = vld [vmem:[#allocation10 + $0x170] sm:$0xff]
    %v1272 = vld [vmem:[#allocation10 + $0x178] sm:$0xff]
    %v1273 = vld [vmem:[%s6] sm:$0x3]
    %v1275 = vlaneseq
    %v1276 = vshrl.u32 %v1275, 7
    %v1277 = vsub.s32 0, %v1276
    %v1278 = vrot.slane %v1273, %v1277
    %v1279 = vlaneseq
    %v1280 = vshrl.u32 %v1279, 7
    %v1281 = vsub.s32 1, %v1280
    %v1282 = vrot.slane %v1273, %v1281
    %v1333 = vunpack.c.l.b16 %v1225
    %v1334 = vunpack.c.h.b16 %v1225
    %v1335 = vunpack.c.l.b16 %v1226
    %v1336 = vunpack.c.h.b16 %v1226
    %v1337 = vunpack.c.l.b16 %v1227
    %v1338 = vunpack.c.h.b16 %v1227
    %v1339 = vunpack.c.l.b16 %v1228
    %v1340 = vunpack.c.h.b16 %v1228
    %v1341 = vunpack.c.l.b16 %v1229
    %v1342 = vunpack.c.h.b16 %v1229
    %v1343 = vunpack.c.l.b16 %v1230
    %v1344 = vunpack.c.h.b16 %v1230
    %v1345 = vunpack.c.l.b16 %v1231
    %v1346 = vunpack.c.h.b16 %v1231
    %v1347 = vunpack.c.l.b16 %v1232
    %v1348 = vunpack.c.h.b16 %v1232
    %v1349 = vunpack.c.l.b16 %v1233
    %v1350 = vunpack.c.h.b16 %v1233
    %v1351 = vunpack.c.l.b16 %v1234
    %v1352 = vunpack.c.h.b16 %v1234
    %v1353 = vunpack.c.l.b16 %v1235
    %v1354 = vunpack.c.h.b16 %v1235
    %v1355 = vunpack.c.l.b16 %v1236
    %v1356 = vunpack.c.h.b16 %v1236
    %v1357 = vunpack.c.l.b16 %v1237
    %v1358 = vunpack.c.h.b16 %v1237
    %v1359 = vunpack.c.l.b16 %v1238
    %v1360 = vunpack.c.h.b16 %v1238
    %v1361 = vunpack.c.l.b16 %v1239
    %v1362 = vunpack.c.h.b16 %v1239
    %v1363 = vunpack.c.l.b16 %v1240
    %v1364 = vunpack.c.h.b16 %v1240
    %v1365 = vunpack.c.l.b16 %v1241
    %v1366 = vunpack.c.h.b16 %v1241
    %v1367 = vunpack.c.l.b16 %v1242
    %v1368 = vunpack.c.h.b16 %v1242
    %v1369 = vunpack.c.l.b16 %v1243
    %v1370 = vunpack.c.h.b16 %v1243
    %v1371 = vunpack.c.l.b16 %v1244
    %v1372 = vunpack.c.h.b16 %v1244
    %v1373 = vunpack.c.l.b16 %v1245
    %v1374 = vunpack.c.h.b16 %v1245
    %v1375 = vunpack.c.l.b16 %v1246
    %v1376 = vunpack.c.h.b16 %v1246
    %v1377 = vunpack.c.l.b16 %v1247
    %v1378 = vunpack.c.h.b16 %v1247
    %v1379 = vunpack.c.l.b16 %v1248
    %v1380 = vunpack.c.h.b16 %v1248
    %v1381 = vunpack.c.l.b16 %v1249
    %v1382 = vunpack.c.h.b16 %v1249
    %v1383 = vunpack.c.l.b16 %v1250
    %v1384 = vunpack.c.h.b16 %v1250
    %v1385 = vunpack.c.l.b16 %v1251
    %v1386 = vunpack.c.h.b16 %v1251
    %v1387 = vunpack.c.l.b16 %v1252
    %v1388 = vunpack.c.h.b16 %v1252
    %v1389 = vunpack.c.l.b16 %v1253
    %v1390 = vunpack.c.h.b16 %v1253
    %v1391 = vunpack.c.l.b16 %v1254
    %v1392 = vunpack.c.h.b16 %v1254
    %v1393 = vunpack.c.l.b16 %v1255
    %v1394 = vunpack.c.h.b16 %v1255
    %v1395 = vunpack.c.l.b16 %v1256
    %v1396 = vunpack.c.h.b16 %v1256
    %v1397 = vunpack.c.l.b16 %v1257
    %v1398 = vunpack.c.h.b16 %v1257
    %v1399 = vunpack.c.l.b16 %v1258
    %v1400 = vunpack.c.h.b16 %v1258
    %v1401 = vunpack.c.l.b16 %v1259
    %v1402 = vunpack.c.h.b16 %v1259
    %v1403 = vunpack.c.l.b16 %v1260
    %v1404 = vunpack.c.h.b16 %v1260
    %v1405 = vunpack.c.l.b16 %v1261
    %v1406 = vunpack.c.h.b16 %v1261
    %v1407 = vunpack.c.l.b16 %v1262
    %v1408 = vunpack.c.h.b16 %v1262
    %v1409 = vunpack.c.l.b16 %v1263
    %v1410 = vunpack.c.h.b16 %v1263
    %v1411 = vunpack.c.l.b16 %v1264
    %v1412 = vunpack.c.h.b16 %v1264
    %v1413 = vunpack.c.l.b16 %v1265
    %v1414 = vunpack.c.h.b16 %v1265
    %v1415 = vunpack.c.l.b16 %v1266
    %v1416 = vunpack.c.h.b16 %v1266
    %v1417 = vunpack.c.l.b16 %v1267
    %v1418 = vunpack.c.h.b16 %v1267
    %v1419 = vunpack.c.l.b16 %v1268
    %v1420 = vunpack.c.h.b16 %v1268
    %v1421 = vunpack.c.l.b16 %v1269
    %v1422 = vunpack.c.h.b16 %v1269
    %v1423 = vunpack.c.l.b16 %v1270
    %v1424 = vunpack.c.h.b16 %v1270
    %v1425 = vunpack.c.l.b16 %v1271
    %v1426 = vunpack.c.h.b16 %v1271
    %v1427 = vunpack.c.l.b16 %v1272
    %v1428 = vunpack.c.h.b16 %v1272
    %v1429 = vpack.c.b16 %v1335, %v1333
    %v1430 = vpack.c.b16 %v1336, %v1334
    %v1431 = vpack.c.b16 %v1339, %v1337
    %v1432 = vpack.c.b16 %v1340, %v1338
    %v1433 = vpack.c.b16 %v1343, %v1341
    %v1434 = vpack.c.b16 %v1344, %v1342
    %v1435 = vpack.c.b16 %v1347, %v1345
    %v1436 = vpack.c.b16 %v1348, %v1346
    %v1437 = vpack.c.b16 %v1351, %v1349
    %v1438 = vpack.c.b16 %v1352, %v1350
    %v1439 = vpack.c.b16 %v1355, %v1353
    %v1440 = vpack.c.b16 %v1356, %v1354
    %v1441 = vpack.c.b16 %v1359, %v1357
    %v1442 = vpack.c.b16 %v1360, %v1358
    %v1443 = vpack.c.b16 %v1363, %v1361
    %v1444 = vpack.c.b16 %v1364, %v1362
    %v1445 = vpack.c.b16 %v1367, %v1365
    %v1446 = vpack.c.b16 %v1368, %v1366
    %v1447 = vpack.c.b16 %v1371, %v1369
    %v1448 = vpack.c.b16 %v1372, %v1370
    %v1449 = vpack.c.b16 %v1375, %v1373
    %v1450 = vpack.c.b16 %v1376, %v1374
    %v1451 = vpack.c.b16 %v1379, %v1377
    %v1452 = vpack.c.b16 %v1380, %v1378
    %v1453 = vpack.c.b16 %v1383, %v1381
    %v1454 = vpack.c.b16 %v1384, %v1382
    %v1455 = vpack.c.b16 %v1387, %v1385
    %v1456 = vpack.c.b16 %v1388, %v1386
    %v1457 = vpack.c.b16 %v1391, %v1389
    %v1458 = vpack.c.b16 %v1392, %v1390
    %v1459 = vpack.c.b16 %v1395, %v1393
    %v1460 = vpack.c.b16 %v1396, %v1394
    %v1461 = vpack.c.b16 %v1399, %v1397
    %v1462 = vpack.c.b16 %v1400, %v1398
    %v1463 = vpack.c.b16 %v1403, %v1401
    %v1464 = vpack.c.b16 %v1404, %v1402
    %v1465 = vpack.c.b16 %v1407, %v1405
    %v1466 = vpack.c.b16 %v1408, %v1406
    %v1467 = vpack.c.b16 %v1411, %v1409
    %v1468 = vpack.c.b16 %v1412, %v1410
    %v1469 = vpack.c.b16 %v1415, %v1413
    %v1470 = vpack.c.b16 %v1416, %v1414
    %v1471 = vpack.c.b16 %v1419, %v1417
    %v1472 = vpack.c.b16 %v1420, %v1418
    %v1473 = vpack.c.b16 %v1423, %v1421
    %v1474 = vpack.c.b16 %v1424, %v1422
    %v1475 = vpack.c.b16 %v1427, %v1425
    %v1476 = vpack.c.b16 %v1428, %v1426
    %1525 = vmatprep.subr.bf16.mxu0 %v1444
    %1526 = vmatpush1.bf16.msra.mxu0 %v1443
    %1527 = vmatprep.subr.bf16.mxu0 %v1442
    %1528 = vmatpush1.bf16.msra.mxu0 %v1441
    %1529 = vmatprep.subr.bf16.mxu0 %v1440
    %1530 = vmatpush1.bf16.msra.mxu0 %v1439
    %1531 = vmatprep.subr.bf16.mxu0 %v1438
    %1532 = vmatpush1.bf16.msra.mxu0 %v1437
    %1533 = vmatprep.subr.bf16.mxu0 %v1436
    %1534 = vmatpush1.bf16.msra.mxu0 %v1435
    %1535 = vmatprep.subr.bf16.mxu0 %v1434
    %1536 = vmatpush1.bf16.msra.mxu0 %v1433
    %1537 = vmatprep.subr.bf16.mxu0 %v1432
    %1538 = vmatpush1.bf16.msra.mxu0 %v1431
    %1539 = vmatprep.subr.bf16.mxu0 %v1430
    %1540 = vmatpush1.bf16.msra.mxu0 %v1429
    %1541 = vmatprep.subr.bf16.mxu0 %v1460
    %1542 = vmatpush2.bf16.msra.mxu0 %v1459
    %1543 = vmatprep.subr.bf16.mxu0 %v1458
    %1544 = vmatpush2.bf16.msra.mxu0 %v1457
    %1545 = vmatprep.subr.bf16.mxu0 %v1456
    %1546 = vmatpush2.bf16.msra.mxu0 %v1455
    %1547 = vmatprep.subr.bf16.mxu0 %v1454
    %1548 = vmatpush2.bf16.msra.mxu0 %v1453
    %1549 = vmatprep.subr.bf16.mxu0 %v1452
    %1550 = vmatpush2.bf16.msra.mxu0 %v1451
    %1551 = vmatprep.subr.bf16.mxu0 %v1450
    %1552 = vmatpush2.bf16.msra.mxu0 %v1449
    %1553 = vmatprep.subr.bf16.mxu0 %v1448
    %1554 = vmatpush2.bf16.msra.mxu0 %v1447
    %1555 = vmatprep.subr.bf16.mxu0 %v1446
    %1556 = vmatpush2.bf16.msra.mxu0 %v1445
    %1557 = vmatprep.mubr.bf16.mxu0 %v1223
    %1558 = vmatmul.mubr.bf16.gmra.mxu0 %v1222
    %v1559 = vpop.f32.mrf.mxu0
    %v1560 = vadd.f32 %v1278, %v1559
    %v1561 = vpop.f32.mrf.mxu0
    %v1562 = vadd.f32 %v1282, %v1561
    %v1563 = vpop.f32.mrf.mxu0
    %v1564 = vpop.f32.mrf.mxu0
    %1565 = vdwg.mxu0
    %1566 = vmatprep.subr.bf16.mxu0 %v1476
    %1567 = vmatpush1.bf16.msra.mxu0 %v1475
    %1568 = vmatprep.subr.bf16.mxu0 %v1474
    %1569 = vmatpush1.bf16.msra.mxu0 %v1473
    %1570 = vmatprep.subr.bf16.mxu0 %v1472
    %1571 = vmatpush1.bf16.msra.mxu0 %v1471
    %1572 = vmatprep.subr.bf16.mxu0 %v1470
    %1573 = vmatpush1.bf16.msra.mxu0 %v1469
    %1574 = vmatprep.subr.bf16.mxu0 %v1468
    %1575 = vmatpush1.bf16.msra.mxu0 %v1467
    %1576 = vmatprep.subr.bf16.mxu0 %v1466
    %1577 = vmatpush1.bf16.msra.mxu0 %v1465
    %1578 = vmatprep.subr.bf16.mxu0 %v1464
    %1579 = vmatpush1.bf16.msra.mxu0 %v1463
    %1580 = vmatprep.subr.bf16.mxu0 %v1462
    %1581 = vmatpush1.bf16.msra.mxu0 %v1461
    %1582 = vmatprep.subr.bf16.mxu0 0
    %1583 = vmatpush2.bf16.msra.mxu0 0
    %1584 = vmatprep.subr.bf16.mxu0 0
    %1585 = vmatpush2.bf16.msra.mxu0 0
    %1586 = vmatprep.subr.bf16.mxu0 0
    %1587 = vmatpush2.bf16.msra.mxu0 0
    %1588 = vmatprep.subr.bf16.mxu0 0
    %1589 = vmatpush2.bf16.msra.mxu0 0
    %1590 = vmatprep.subr.bf16.mxu0 0
    %1591 = vmatpush2.bf16.msra.mxu0 0
    %1592 = vmatprep.subr.bf16.mxu0 0
    %1593 = vmatpush2.bf16.msra.mxu0 0
    %1594 = vmatprep.subr.bf16.mxu0 0
    %1595 = vmatpush2.bf16.msra.mxu0 0
    %1596 = vmatprep.subr.bf16.mxu0 0
    %1597 = vmatpush2.bf16.msra.mxu0 0
    %1598 = vmatprep.mubr.bf16.mxu0 0
    %1599 = vmatmul.mubr.bf16.gmra.mxu0 %v1224
    %v1600 = vpop.f32.mrf.mxu0
    %v1601 = vadd.f32 %v1560, %v1600
    %v1602 = vpop.f32.mrf.mxu0
    %v1603 = vadd.f32 %v1562, %v1602
    %v1604 = vpop.f32.mrf.mxu0
    %v1605 = vpop.f32.mrf.mxu0
    %1606 = vdwg.mxu0
    %v1607 = vtanh.pop %v1603
    %v1608 = vadd.f32 %v1607, 1.0
    %v1609 = vmul.f32 %v1608, 11.0
    %v1610 = vadd.f32 %v1609, -20.0
    %v1611 = vmul.f32 %v1610, 1.442695
    %v1612 = vpow.pop %v1611
    %v1613 = vld [vmem:[%s7] sm:$0x3]
    %v1614 = vmul.f32 %v1612, %v1613
    %v1615 = vadd.f32 %v1601, %v1614
    %v1616 = vtanh.pop %v1615
    %1617 = vst [vmem:[#allocation11] sm:$0x3] %v1616
    // Predicated region
    $region54: #{tpu_custom_call.1} parent=1 // pred_check
      _
    $region55: #{tpu_custom_call.1} parent=1 // pred_check_branch
      %1619 = sbr.rel (0) target = $region57
    $region56: #{tpu_custom_call.1} parent=1 // pred_region
      %s1621 = ssub.s32 32, 32
      %1622 = vsyncadd [#allocation4], %s1621
      %s1624 = sshll.u32 [#allocation11], 4
      %s1625 = int_to_ptr.vmem [resolvable:$true] %s1624
      %1627 = dma.vmem_to_hbm [thread:$0]  %s1625, 32, %s8, [#allocation4]
    $region57: #{tpu_custom_call.1} parent=1 // pred_fallthru
      _
    // Predicated region
    $region58: #{tpu_custom_call.1} parent=1 // pred_check
      _
    $region59: #{tpu_custom_call.1} parent=1 // pred_check_branch
      %1629 = sbr.rel (0) target = $region61
    $region60: #{tpu_custom_call.1} parent=1 // pred_region
      %1630 = dma.done [#allocation4], 32
    $region61: #{tpu_custom_call.1} parent=1 // pred_fallthru
      _
    %1631 = vsyncpa [#allocation3], 1
    %1632 = vsyncpa [#allocation6], 1
    %1633 = vsyncpa [#allocation9], 1
    %1634 = vsyncpa [#allocation4], 1

</llo_original>
